<compile_context>
chip_gen: v7x
topology: tpu7x:2x2x1
jax: 0.10.0
libtpu: 0.0.40
codegen_flags: <defaults>
</compile_context>

<pallas_src>
import functools

import jax
import jax.numpy as jnp
import numpy as np
from jax.experimental import pallas as pl
from jax.experimental.pallas import tpu as pltpu


def _round_up(n, m):
    return ((n + m - 1) // m) * m


def _dfl_kernel(pred_ref, tgt_ref, anc_ref, w_ref, out_ref, acc_ref, *, reg_max):
    t = pl.program_id(1)

    @pl.when(t == 0)
    def _():
        acc_ref[...] = jnp.zeros_like(acc_ref)

    anc = anc_ref[...].astype(jnp.float32)        # (2, T)
    tbox = tgt_ref[...].astype(jnp.float32)       # (4, T): rows 0,1 = lt ; rows 2,3 = rb
    lt = tbox[0:2]
    rb = tbox[2:4]

    # targets_dist = cat(anchors - lt, rb - anchors).clamp(0, reg_max - 1.01)
    tdist = jnp.clip(jnp.concatenate([anc - lt, rb - anc], axis=0),
                     0.0, reg_max - 1.01)         # (4, T)

    logits = pred_ref[...].astype(jnp.float32)    # (4, R, T); cast after load (bf16 over HBM ok)
    m = jnp.max(logits, axis=1, keepdims=True)                        # (4, 1, T) sublane reduce
    lse = m[:, 0, :] + jnp.log(jnp.sum(jnp.exp(logits - m), axis=1))  # (4, T)   EUP exp/log

    # Fused CE with triangular interpolation weights:
    #   relu(1 - |bin - tdist|) == w_left at bin floor(t), w_right at floor(t)+1, 0 elsewhere,
    # so  w_left*CE(left) + w_right*CE(right) = lse - sum_R(logits * relu(1 - |bin - tdist|)).
    idx = jax.lax.broadcasted_iota(jnp.int32, logits.shape, 1).astype(jnp.float32)
    sel = jnp.maximum(1.0 - jnp.abs(idx - tdist[:, None, :]), 0.0)    # (4, R, T)
    picked = jnp.sum(logits * sel, axis=1)                            # (4, T)

    loss_side = lse - picked                                          # (4, T)

    # w already folds valid_mask * box_norm * 0.25 (mean over the 4 sides); padding entries are 0.
    w = w_ref[...].astype(jnp.float32)                                # (1, T)
    contrib = jnp.where(w > 0.0, loss_side * w, 0.0)                  # NaN-safe zero for invalid
    acc_ref[...] += jnp.sum(contrib, axis=0, keepdims=True)           # (1, T) accumulator

    @pl.when(t == pl.num_programs(1) - 1)
    def _():
        part = jnp.sum(acc_ref[...], axis=1, keepdims=True)           # (1, 1)   lane reduce
        out_ref[...] = jnp.broadcast_to(part, out_ref.shape)          # (1, 128) lane-dense store


def dfl_loss_pallas(predicts_anc, targets_bbox, valid_masks, box_norm, cls_norm,
                    anchors_norm, reg_max, *, tile_anchors=2048, num_partitions=2):
    B, A, four, R = predicts_anc.shape
    assert four == 4 and R == reg_max
    N = B * A

    # --- lane-dense layout plumbing (anchors on the last axis), native dtypes kept ---
    pred = jnp.transpose(predicts_anc, (2, 3, 0, 1)).reshape(4, R, N)     # (4, R, N)
    tgt = jnp.transpose(targets_bbox, (2, 0, 1)).reshape(4, N)            # (4, N)
    anc = jnp.broadcast_to(anchors_norm.T[:, None, :], (2, B, A)).reshape(2, N)  # (2, N)
    # dense-masked equivalent of torch's boolean gather: invalid/padded anchors get weight 0
    w = (valid_masks.astype(jnp.float32) * box_norm.astype(jnp.float32) * 0.25).reshape(1, N)

    T = _round_up(min(tile_anchors, _round_up(N, 128)), 128)
    Npad = _round_up(N, num_partitions * T)
    pad = Npad - N
    if pad:
        pred = jnp.pad(pred, ((0, 0), (0, 0), (0, pad)))
        tgt = jnp.pad(tgt, ((0, 0), (0, pad)))
        anc = jnp.pad(anc, ((0, 0), (0, pad)))
        w = jnp.pad(w, ((0, 0), (0, pad)))

    tiles_per_part = Npad // (num_partitions * T)
    grid = (num_partitions, tiles_per_part)

    def a_idx(p, t):
        return p * tiles_per_part + t

    out = pl.pallas_call(
        functools.partial(_dfl_kernel, reg_max=reg_max),
        out_shape=jax.ShapeDtypeStruct((1, num_partitions * 128), jnp.float32),
        grid_spec=pltpu.PrefetchScalarGridSpec(
            num_scalar_prefetch=0,
            grid=grid,
            in_specs=[
                pl.BlockSpec((4, R, T), lambda p, t: (0, 0, a_idx(p, t))),  # predicts (native dtype)
                pl.BlockSpec((4, T), lambda p, t: (0, a_idx(p, t))),        # targets_bbox
                pl.BlockSpec((2, T), lambda p, t: (0, a_idx(p, t))),        # anchors (broadcast)
                pl.BlockSpec((1, T), lambda p, t: (0, a_idx(p, t))),        # valid*box_norm*0.25
            ],
            out_specs=pl.BlockSpec((1, 128), lambda p, t: (0, p)),          # per-partition partial
            scratch_shapes=[pltpu.VMEM((1, T), jnp.float32)],               # vector accumulator
        ),
        compiler_params=pltpu.CompilerParams(
            dimension_semantics=("parallel", "arbitrary")),
    )(pred, tgt, anc, w)

    partials = out.reshape(num_partitions, 128)[:, 0]
    return jnp.sum(partials) / cls_norm


def dfl_loss_ref(predicts_anc, targets_bbox, valid_masks, box_norm, cls_norm,
                 anchors_norm, reg_max):
    """Pure-JAX reference mirroring the PyTorch forward (dense-masked form)."""
    lt, rb = targets_bbox[..., :2], targets_bbox[..., 2:]
    an = anchors_norm[None]
    tdist = jnp.clip(jnp.concatenate([an - lt, rb - an], -1), 0.0, reg_max - 1.01)
    logp = jax.nn.log_softmax(predicts_anc.astype(jnp.float32), axis=-1)
    ll = jnp.floor(tdist)
    lr = ll + 1.0
    wl, wr = lr - tdist, tdist - ll
    lp_l = jnp.take_along_axis(logp, ll.astype(jnp.int32)[..., None], -1)[..., 0]
    lp_r = jnp.take_along_axis(logp, lr.astype(jnp.int32)[..., None], -1)[..., 0]
    loss = -(lp_l * wl + lp_r * wr)                  # (B, A, 4)
    loss_a = loss.mean(-1)                           # (B, A)
    return jnp.sum(loss_a * box_norm * valid_masks.astype(jnp.float32)) / cls_norm


if __name__ == "__main__":
    B = 2
    reg_max = 16
    grid_hw = 16
    A = grid_hw * grid_hw          # 256 anchors (one 16x16 feature level)
    stride = 8.0

    # Deterministic "parameter" init (module __init__): anchors_norm = anchor_grid / scaler
    ys, xs = jnp.meshgrid(jnp.arange(grid_hw), jnp.arange(grid_hw), indexing="ij")
    anchor_grid = (jnp.stack([xs, ys], -1).reshape(-1, 2).astype(jnp.float32) + 0.5) * stride
    scaler = jnp.full((A,), stride, jnp.float32)
    anchors_norm = anchor_grid / scaler[:, None]     # (A, 2)

    key = jax.random.PRNGKey(0)
    k1, k2, k3, k4, k5 = jax.random.split(key, 5)
    predicts_anc = jax.random.normal(k1, (B, A, 4, reg_max), jnp.float32)
    off_lt = jax.random.uniform(k2, (B, A, 2), minval=0.5, maxval=12.0)
    off_rb = jax.random.uniform(k3, (B, A, 2), minval=0.5, maxval=12.0)
    an = anchors_norm[None]
    targets_bbox = jnp.concatenate([an - off_lt, an + off_rb], -1)   # (B, A, 4)
    valid_masks = jax.random.uniform(k4, (B, A)) > 0.5
    box_norm = jax.random.uniform(k5, (B, A), minval=0.1, maxval=1.0)
    cls_norm = jnp.float32(jnp.sum(valid_masks)) + 1.0

    # tile_anchors=128 at this small size so the demo exercises multiple tiles per partition.
    out = dfl_loss_pallas(predicts_anc, targets_bbox, valid_masks, box_norm,
                          cls_norm, anchors_norm, reg_max,
                          tile_anchors=128, num_partitions=2)
    out = jax.block_until_ready(out)

    ref = dfl_loss_ref(predicts_anc, targets_bbox, valid_masks, box_norm,
                       cls_norm, anchors_norm, reg_max)
    np.testing.assert_allclose(np.asarray(out), np.asarray(ref), rtol=1e-4, atol=1e-5)

    print("KERNEL_OK")
</pallas_src>

<mosaic_0001>
module attributes {stable_mosaic.version = 11 : i64} {
  func.func @_dfl_kernel(%arg0: i32, %arg1: i32, %arg2: memref<4x16x128xf32, #tpu.memory_space<vmem>>, %arg3: memref<4x128xf32, #tpu.memory_space<vmem>>, %arg4: memref<2x128xf32, #tpu.memory_space<vmem>>, %arg5: memref<1x128xf32, #tpu.memory_space<vmem>>, %arg6: memref<1x128xf32, #tpu.memory_space<vmem>>, %arg7: memref<1x128xf32, #tpu.memory_space<vmem>>) attributes {dimension_semantics = [#tpu.dimension_semantics<parallel>, #tpu.dimension_semantics<arbitrary>], iteration_bounds = array<i64: 2, 2>, scalar_prefetch = 0 : i64, scratch_operands = 1 : i64, tpu.core_type = #tpu.core_type<tc>, window_params = [{transform_indices = @transform_0, window_bounds = array<i64: 4, 16, 128>}, {transform_indices = @transform_1, window_bounds = array<i64: 4, 128>}, {transform_indices = @transform_2, window_bounds = array<i64: 2, 128>}, {transform_indices = @transform_3, window_bounds = array<i64: 1, 128>}, {transform_indices = @transform_4, window_bounds = array<i64: 1, 128>}]} {
    %c0_i32 = arith.constant 0 : i32
    %0 = arith.cmpi eq, %arg1, %c0_i32 : i32
    %1 = arith.extui %0 : i1 to i32
    %c0_i32_0 = arith.constant 0 : i32
    %2 = arith.cmpi ne, %1, %c0_i32_0 : i32
    scf.if %2 {
      %cst_23 = arith.constant 0.000000e+00 : f32
      %54 = vector.broadcast %cst_23 : f32 to vector<1x128xf32>
      %c0_24 = arith.constant 0 : index
      %c0_25 = arith.constant 0 : index
      %55 = vector.load %arg7[%c0_24, %c0_25] : memref<1x128xf32, #tpu.memory_space<vmem>>, vector<1x128xf32>
      tpu.vector_store %arg7[%c0_24, %c0_25], %54 {strides = array<i32>} : memref<1x128xf32, #tpu.memory_space<vmem>>, vector<1x128xf32>,
    } else {
    }
    %c0 = arith.constant 0 : index
    %c0_1 = arith.constant 0 : index
    %3 = vector.load %arg4[%c0, %c0_1] : memref<2x128xf32, #tpu.memory_space<vmem>>, vector<2x128xf32>
    %c0_2 = arith.constant 0 : index
    %c0_3 = arith.constant 0 : index
    %4 = vector.load %arg3[%c0_2, %c0_3] : memref<4x128xf32, #tpu.memory_space<vmem>>, vector<4x128xf32>
    %5 = vector.extract_strided_slice %4 {offsets = [0, 0], sizes = [2, 128], strides = [1, 1]} : vector<4x128xf32> to vector<2x128xf32>
    %6 = vector.extract_strided_slice %4 {offsets = [2, 0], sizes = [2, 128], strides = [1, 1]} : vector<4x128xf32> to vector<2x128xf32>
    %7 = arith.subf %3, %5 : vector<2x128xf32>
    %8 = arith.subf %6, %3 : vector<2x128xf32>
    %9 = tpu.concatenate %7, %8 in 0 : vector<2x128xf32>, vector<2x128xf32> -> vector<4x128xf32>
    %cst = arith.constant 0.000000e+00 : f32
    %cst_4 = arith.constant 1.499000e+01 : f32
    %10 = vector.broadcast %cst : f32 to vector<4x128xf32>
    %11 = arith.maximumf %10, %9 : vector<4x128xf32>
    %12 = vector.broadcast %cst_4 : f32 to vector<4x128xf32>
    %13 = arith.minimumf %12, %11 : vector<4x128xf32>
    %c0_5 = arith.constant 0 : index
    %c0_6 = arith.constant 0 : index
    %c0_7 = arith.constant 0 : index
    %14 = vector.load %arg2[%c0_5, %c0_6, %c0_7] : memref<4x16x128xf32, #tpu.memory_space<vmem>>, vector<4x16x128xf32>
    %cst_8 = arith.constant dense<0xFF800000> : vector<4x128xf32>
    %15 = vector.multi_reduction <maximumf>, %14, %cst_8 [1] : vector<4x16x128xf32> to vector<4x128xf32>
    %16 = vector.shape_cast %15 : vector<4x128xf32> to vector<4x1x128xf32>
    %17 = vector.shape_cast %16 : vector<4x1x128xf32> to vector<4x128xf32>
    %18 = vector.broadcast %16 : vector<4x1x128xf32> to vector<4x16x128xf32>
    %19 = arith.subf %14, %18 : vector<4x16x128xf32>
    %20 = math.exp %19 : vector<4x16x128xf32>
    %cst_9 = arith.constant dense<0.000000e+00> : vector<4x128xf32>
    %21 = vector.multi_reduction <add>, %20, %cst_9 [1] : vector<4x16x128xf32> to vector<4x128xf32>
    %22 = math.log %21 : vector<4x128xf32>
    %23 = arith.addf %17, %22 : vector<4x128xf32>
    %24 = tpu.iota {dimensions = array<i32: 1>} : vector<4x16x128xi32>
    %25 = arith.sitofp %24 : vector<4x16x128xi32> to vector<4x16x128xf32>
    %26 = vector.shape_cast %13 : vector<4x128xf32> to vector<4x1x128xf32>
    %27 = vector.broadcast %26 : vector<4x1x128xf32> to vector<4x16x128xf32>
    %28 = arith.subf %25, %27 : vector<4x16x128xf32>
    %29 = math.absf %28 : vector<4x16x128xf32>
    %cst_10 = arith.constant 1.000000e+00 : f32
    %30 = vector.broadcast %cst_10 : f32 to vector<4x16x128xf32>
    %31 = arith.subf %30, %29 : vector<4x16x128xf32>
    %cst_11 = arith.constant 0.000000e+00 : f32
    %32 = vector.broadcast %cst_11 : f32 to vector<4x16x128xf32>
    %33 = arith.maximumf %31, %32 : vector<4x16x128xf32>
    %34 = arith.mulf %14, %33 : vector<4x16x128xf32>
    %cst_12 = arith.constant dense<0.000000e+00> : vector<4x128xf32>
    %35 = vector.multi_reduction <add>, %34, %cst_12 [1] : vector<4x16x128xf32> to vector<4x128xf32>
    %36 = arith.subf %23, %35 : vector<4x128xf32>
    %c0_13 = arith.constant 0 : index
    %c0_14 = arith.constant 0 : index
    %37 = vector.load %arg5[%c0_13, %c0_14] : memref<1x128xf32, #tpu.memory_space<vmem>>, vector<1x128xf32>
    %cst_15 = arith.constant 0.000000e+00 : f32
    %38 = vector.broadcast %cst_15 : f32 to vector<1x128xf32>
    %39 = arith.cmpf ogt, %37, %38 : vector<1x128xf32>
    %40 = vector.broadcast %37 : vector<1x128xf32> to vector<4x128xf32>
    %41 = arith.mulf %36, %40 : vector<4x128xf32>
    %cst_16 = arith.constant 0.000000e+00 : f32
    %42 = vector.shape_cast %39 : vector<1x128xi1> to vector<1x128xi1>
    %43 = vector.broadcast %42 : vector<1x128xi1> to vector<4x128xi1>
    %44 = vector.broadcast %cst_16 : f32 to vector<4x128xf32>
    %45 = arith.select %43, %41, %44 : vector<4x128xi1>, vector<4x128xf32>
    %c0_17 = arith.constant 0 : index
    %c0_18 = arith.constant 0 : index
    %46 = vector.load %arg7[%c0_17, %c0_18] : memref<1x128xf32, #tpu.memory_space<vmem>>, vector<1x128xf32>
    %cst_19 = arith.constant dense<0.000000e+00> : vector<128xf32>
    %47 = vector.multi_reduction <add>, %45, %cst_19 [0] : vector<4x128xf32> to vector<128xf32>
    %48 = vector.shape_cast %47 : vector<128xf32> to vector<1x128xf32>
    %49 = arith.addf %46, %48 : vector<1x128xf32>
    %c0_20 = arith.constant 0 : index
    %c0_21 = arith.constant 0 : index
    %50 = vector.load %arg7[%c0_20, %c0_21] : memref<1x128xf32, #tpu.memory_space<vmem>>, vector<1x128xf32>
    tpu.vector_store %arg7[%c0_20, %c0_21], %49 {strides = array<i32>} : memref<1x128xf32, #tpu.memory_space<vmem>>, vector<1x128xf32>,
    %c1_i32 = arith.constant 1 : i32
    %51 = arith.cmpi eq, %arg1, %c1_i32 : i32
    %52 = arith.extui %51 : i1 to i32
    %c0_i32_22 = arith.constant 0 : i32
    %53 = arith.cmpi ne, %52, %c0_i32_22 : i32
    scf.if %53 {
      %c0_23 = arith.constant 0 : index
      %c0_24 = arith.constant 0 : index
      %54 = vector.load %arg7[%c0_23, %c0_24] : memref<1x128xf32, #tpu.memory_space<vmem>>, vector<1x128xf32>
      %cst_25 = arith.constant dense<0.000000e+00> : vector<1xf32>
      %55 = vector.multi_reduction <add>, %54, %cst_25 [1] : vector<1x128xf32> to vector<1xf32>
      %56 = vector.shape_cast %55 : vector<1xf32> to vector<1x1xf32>
      %57 = vector.shape_cast %56 : vector<1x1xf32> to vector<1x1xf32>
      %58 = vector.broadcast %57 : vector<1x1xf32> to vector<1x128xf32>
      %c0_26 = arith.constant 0 : index
      %c0_27 = arith.constant 0 : index
      %59 = vector.load %arg6[%c0_26, %c0_27] : memref<1x128xf32, #tpu.memory_space<vmem>>, vector<1x128xf32>
      tpu.vector_store %arg6[%c0_26, %c0_27], %58 {strides = array<i32>} : memref<1x128xf32, #tpu.memory_space<vmem>>, vector<1x128xf32>,
    } else {
    }
    return
  }
  func.func @transform_0(%arg0: i32, %arg1: i32) -> (i32, i32, i32) {
    %c2_i32 = arith.constant 2 : i32
    %0 = arith.muli %arg0, %c2_i32 : i32
    %1 = arith.addi %0, %arg1 : i32
    %c0_i32 = arith.constant 0 : i32
    %c0_i32_0 = arith.constant 0 : i32
    %c0_i32_1 = arith.constant 0 : i32
    return %c0_i32, %c0_i32_0, %1 : i32, i32, i32
  }
  func.func @transform_1(%arg0: i32, %arg1: i32) -> (i32, i32) {
    %c2_i32 = arith.constant 2 : i32
    %0 = arith.muli %arg0, %c2_i32 : i32
    %1 = arith.addi %0, %arg1 : i32
    %c0_i32 = arith.constant 0 : i32
    %c0_i32_0 = arith.constant 0 : i32
    return %c0_i32, %1 : i32, i32
  }
  func.func @transform_2(%arg0: i32, %arg1: i32) -> (i32, i32) {
    %c2_i32 = arith.constant 2 : i32
    %0 = arith.muli %arg0, %c2_i32 : i32
    %1 = arith.addi %0, %arg1 : i32
    %c0_i32 = arith.constant 0 : i32
    %c0_i32_0 = arith.constant 0 : i32
    return %c0_i32, %1 : i32, i32
  }
  func.func @transform_3(%arg0: i32, %arg1: i32) -> (i32, i32) {
    %c2_i32 = arith.constant 2 : i32
    %0 = arith.muli %arg0, %c2_i32 : i32
    %1 = arith.addi %0, %arg1 : i32
    %c0_i32 = arith.constant 0 : i32
    %c0_i32_0 = arith.constant 0 : i32
    return %c0_i32, %1 : i32, i32
  }
  func.func @transform_4(%arg0: i32, %arg1: i32) -> (i32, i32) {
    %c0_i32 = arith.constant 0 : i32
    %c0_i32_0 = arith.constant 0 : i32
    return %c0_i32, %arg0 : i32, i32
  }
}

</mosaic_0001>

<llo_original>
// kernel: tpu_custom_call.1
$region0: #{tpu_custom_call.1}
  #allocation0 [shape = 'u32[]', space=smem, size = 0x4, offset = 0x4, fixed_abs, tag = 'smem constant byte address 0x4 - core index']
  #allocation1 [shape = 'u32[144,128]{1,0:T(1,128)}', space=vmem, size = 0x12000, scoped, tag = 'internal scratch']
  #allocation2 [shape = 'f32[1,128]{1,0:T(1,128)}', space=vmem, size = 0x200, scoped, tag = 'scratch operand']
  %s0 = inlined_call_operand.hbm [shape: f32[4,16,512], index: 0, kind: input, shape index: {}]
  %s1 = inlined_call_operand.hbm [shape: f32[4,512], index: 1, kind: input, shape index: {}]
  %s2 = inlined_call_operand.hbm [shape: f32[2,512], index: 2, kind: input, shape index: {}]
  %s3 = inlined_call_operand.vmem [shape: f32[1,512], index: 3, kind: input, shape index: {}]
  %s4 = inlined_call_operand.hbm [shape: f32[1,256], index: 4, kind: output, shape index: {}]
  %s5 = sld [smem:[#allocation0]]
  $region69: #{tpu_custom_call.1} parent=0
    _
  %s7 = ssub.s32 1, %s5
  %s8 = scalar_select 0, %s7, %s5
  $region1: #{tpu_custom_call.1} parent=0
    #allocation3 [shape = 'u8[65536]{0}', space=vmem, size = 0x10000, scoped, tag = 'input window, operand 0']
    #allocation4 [shape = 's32[2]{0}', space=sflag, size = 0x8, scoped, tag = 'scoped memory for tpu_custom_call.1']
    #allocation5 [shape = 's32[2]{0}', space=sflag, size = 0x8, scoped, tag = 'scoped memory for tpu_custom_call.1']
    #allocation6 [shape = 'u8[4096]{0}', space=vmem, size = 0x1000, scoped, tag = 'input window, operand 1']
    #allocation7 [shape = 's32[2]{0}', space=sflag, size = 0x8, scoped, tag = 'scoped memory for tpu_custom_call.1']
    #allocation8 [shape = 'u8[2048]{0}', space=vmem, size = 0x800, scoped, tag = 'input window, operand 2']
    #allocation9 [shape = 'u8[1024]{0}', space=vmem, size = 0x400, scoped, tag = 'output window, operand 0']
    %9 = vsyncpa [#allocation4], 0
    %s10 = scalar_lea.sflag [#allocation4], 1
    %11 = vsyncpa %s10, 0
    %12 = vsyncpa [#allocation7], 0
    %s13 = scalar_lea.sflag [#allocation7], 1
    %14 = vsyncpa %s13, 0
    %15 = vsyncpa [#allocation5], 0
    %s16 = scalar_lea.sflag [#allocation5], 1
    %17 = vsyncpa %s16, 0
    loop: start=0, step=1, limit=6
    $region2: #{tpu_custom_call.1} parent=1 // loop_pre_header
      _
    $region3: #{tpu_custom_call.1} parent=1 // loop_header
      %s19 = sphi 0, %s23
      %p20 = scmp.ge.s32.totalorder %s19, 6
      %s26 = sphi 0, %s38
      %s27 = sphi 0, %s34
      %s28 = sphi 0, %s26
      %s29 = sphi 0, %s27
      %s30 = sphi 0, %s28
      %s31 = sphi 0, %s29
      %s45 = sphi 0, %s47
      %s48 = sphi 0, %s45
      %s49 = sphi 0, %s48
      %s65 = sphi 0, %s49
      %s75 = sphi 0, %s77
      %s78 = sphi 0, %s75
      %s79 = sphi 0, %s78
      %s95 = sphi 0, %s79
      %s105 = sphi 0, %s107
      %s108 = sphi 0, %s105
      %s109 = sphi 0, %s108
      %s125 = sphi 0, %s109
      %s135 = sphi 0, %s137
      %s138 = sphi 0, %s135
      %s139 = sphi 0, %s138
      %s155 = sphi 0, %s139
      %s161 = sphi 0, %s163
      %s164 = sphi 0, %s161
      %s165 = sphi 0, %s164
      %s181 = sphi 0, %s165
    $region4: #{tpu_custom_call.1} parent=1 // loop_header_branch
      %22 = sbr.rel (%p20) target = $region8
    $region5: #{tpu_custom_call.1} parent=1 // loop_body
      %s24 = ssub.s32 %s19, 1
      %s25 = ssub.s32 %s19, 2
      %s32 = sadd.s32 1, %s27
      %p33 = scmp.ge.s32.totalorder %s32, 2
      %s34 = scalar_select %p33, 0, %s32
      %s35 = sadd.s32 1, %s26
      %s36 = scalar_select %p33, %s35, %s26
      %p37 = scmp.ge.s32.totalorder %s36, 2
      %s38 = scalar_select %p37, 0, %s36
      %s39 = smul.u32 %s26, 2
      %s40 = sadd.s32 %s39, %s27
      %s41 = smul.u32 %s38, 2
      %s42 = sadd.s32 %s41, %s34
      %s43 = ssub.s32 %s40, %s42
      %p44 = scmp.eq.s32.totalorder %s43, 0
      %s46 = sadd.s32 %s45, 1
      %s47 = scalar_select %p44, %s45, %s46
      %p50 = pneg %p44
      %p51 = scmp.eq.s32.totalorder %s19, 3
      %p52 = por %p50, %p51
      %p53 = scmp.ne.s32.totalorder %s45, %s48
      %p54 = scmp.eq.s32.totalorder %s19, 0
      %p55 = por %p53, %p54
      %p56 = scmp.ne.s32.totalorder %s45, %s48
      %p57 = scmp.eq.s32.totalorder %s24, 3
      %p58 = por %p56, %p57
      %p59 = scmp.ne.s32.totalorder %s48, %s49
      %p60 = scmp.eq.s32.totalorder %s24, 0
      %p61 = por %p59, %p60
      %p62 = scmp.ne.s32.totalorder %s48, %s49
      %p63 = scmp.eq.s32.totalorder %s25, 3
      %p64 = por %p62, %p63
      %p66 = scmp.ne.s32.totalorder %s49, %s65
      %p67 = scmp.eq.s32.totalorder %s25, 0
      %p68 = por %p66, %p67
      %s69 = smul.u32 %s26, 2
      %s70 = sadd.s32 %s69, %s27
      %s71 = smul.u32 %s38, 2
      %s72 = sadd.s32 %s71, %s34
      %s73 = ssub.s32 %s70, %s72
      %p74 = scmp.eq.s32.totalorder %s73, 0
      %s76 = sadd.s32 %s75, 1
      %s77 = scalar_select %p74, %s75, %s76
      %p80 = pneg %p74
      %p81 = scmp.eq.s32.totalorder %s19, 3
      %p82 = por %p80, %p81
      %p83 = scmp.ne.s32.totalorder %s75, %s78
      %p84 = scmp.eq.s32.totalorder %s19, 0
      %p85 = por %p83, %p84
      %p86 = scmp.ne.s32.totalorder %s75, %s78
      %p87 = scmp.eq.s32.totalorder %s24, 3
      %p88 = por %p86, %p87
      %p89 = scmp.ne.s32.totalorder %s78, %s79
      %p90 = scmp.eq.s32.totalorder %s24, 0
      %p91 = por %p89, %p90
      %p92 = scmp.ne.s32.totalorder %s78, %s79
      %p93 = scmp.eq.s32.totalorder %s25, 3
      %p94 = por %p92, %p93
      %p96 = scmp.ne.s32.totalorder %s79, %s95
      %p97 = scmp.eq.s32.totalorder %s25, 0
      %p98 = por %p96, %p97
      %s99 = smul.u32 %s26, 2
      %s100 = sadd.s32 %s99, %s27
      %s101 = smul.u32 %s38, 2
      %s102 = sadd.s32 %s101, %s34
      %s103 = ssub.s32 %s100, %s102
      %p104 = scmp.eq.s32.totalorder %s103, 0
      %s106 = sadd.s32 %s105, 1
      %s107 = scalar_select %p104, %s105, %s106
      %p110 = pneg %p104
      %p111 = scmp.eq.s32.totalorder %s19, 3
      %p112 = por %p110, %p111
      %p113 = scmp.ne.s32.totalorder %s105, %s108
      %p114 = scmp.eq.s32.totalorder %s19, 0
      %p115 = por %p113, %p114
      %p116 = scmp.ne.s32.totalorder %s105, %s108
      %p117 = scmp.eq.s32.totalorder %s24, 3
      %p118 = por %p116, %p117
      %p119 = scmp.ne.s32.totalorder %s108, %s109
      %p120 = scmp.eq.s32.totalorder %s24, 0
      %p121 = por %p119, %p120
      %p122 = scmp.ne.s32.totalorder %s108, %s109
      %p123 = scmp.eq.s32.totalorder %s25, 3
      %p124 = por %p122, %p123
      %p126 = scmp.ne.s32.totalorder %s109, %s125
      %p127 = scmp.eq.s32.totalorder %s25, 0
      %p128 = por %p126, %p127
      %s129 = smul.u32 %s26, 2
      %s130 = sadd.s32 %s129, %s27
      %s131 = smul.u32 %s38, 2
      %s132 = sadd.s32 %s131, %s34
      %s133 = ssub.s32 %s130, %s132
      %p134 = scmp.eq.s32.totalorder %s133, 0
      %s136 = sadd.s32 %s135, 1
      %s137 = scalar_select %p134, %s135, %s136
      %p140 = pneg %p134
      %p141 = scmp.eq.s32.totalorder %s19, 3
      %p142 = por %p140, %p141
      %p143 = scmp.ne.s32.totalorder %s135, %s138
      %p144 = scmp.eq.s32.totalorder %s19, 0
      %p145 = por %p143, %p144
      %p146 = scmp.ne.s32.totalorder %s135, %s138
      %p147 = scmp.eq.s32.totalorder %s24, 3
      %p148 = por %p146, %p147
      %p149 = scmp.ne.s32.totalorder %s138, %s139
      %p150 = scmp.eq.s32.totalorder %s24, 0
      %p151 = por %p149, %p150
      %p152 = scmp.ne.s32.totalorder %s138, %s139
      %p153 = scmp.eq.s32.totalorder %s25, 3
      %p154 = por %p152, %p153
      %p156 = scmp.ne.s32.totalorder %s139, %s155
      %p157 = scmp.eq.s32.totalorder %s25, 0
      %p158 = por %p156, %p157
      %s159 = ssub.s32 %s26, %s38
      %p160 = scmp.eq.s32.totalorder %s159, 0
      %s162 = sadd.s32 %s161, 1
      %s163 = scalar_select %p160, %s161, %s162
      %p166 = pneg %p160
      %p167 = scmp.eq.s32.totalorder %s19, 3
      %p168 = por %p166, %p167
      %p169 = scmp.ne.s32.totalorder %s161, %s164
      %p170 = scmp.eq.s32.totalorder %s19, 0
      %p171 = por %p169, %p170
      %p172 = scmp.ne.s32.totalorder %s161, %s164
      %p173 = scmp.eq.s32.totalorder %s24, 3
      %p174 = por %p172, %p173
      %p175 = scmp.ne.s32.totalorder %s164, %s165
      %p176 = scmp.eq.s32.totalorder %s24, 0
      %p177 = por %p175, %p176
      %p178 = scmp.ne.s32.totalorder %s164, %s165
      %p179 = scmp.eq.s32.totalorder %s25, 3
      %p180 = por %p178, %p179
      %p182 = scmp.ne.s32.totalorder %s165, %s181
      %p183 = scmp.eq.s32.totalorder %s25, 0
      %p184 = por %p182, %p183
      %p185 = scmp.le.s32.totalorder 1, %s19
      %p186 = scmp.lt.s32.totalorder %s19, 5
      %p187 = pnand %p185, %p186
      %p188 = pneg %p187
      // Predicated region
      $region9: #{tpu_custom_call.1} parent=5 // pred_check
        _
      $region10: #{tpu_custom_call.1} parent=5 // pred_check_branch
        %190 = sbr.rel (%p187) target = $region12
      $region11: #{tpu_custom_call.1} parent=5 // pred_region
        %s191 = ssub.s32 %s19, 1
      $region12: #{tpu_custom_call.1} parent=5 // pred_fallthru
        _
      %p192 = scmp.lt.s32.totalorder %s19, 4
      // Predicated region
      $region13: #{tpu_custom_call.1} parent=5 // pred_check
        %p193 = pneg %p192
      $region14: #{tpu_custom_call.1} parent=5 // pred_check_branch
        %195 = sbr.rel (%p193) target = $region16
      $region15: #{tpu_custom_call.1} parent=5 // pred_region
        // Predicated region
        $region17: #{tpu_custom_call.1} parent=15 // pred_check
          %p196 = pneg %p55
        $region18: #{tpu_custom_call.1} parent=15 // pred_check_branch
          %198 = sbr.rel (%p196) target = $region20
        $region19: #{tpu_custom_call.1} parent=15 // pred_region
          %s199 = sand.u32 %s45, 1
          %s200 = scalar_lea.sflag [#allocation4], %s199
          %s201 = sand.u32 %s45, 1
          %s202 = smul.addr %s201, 64
          %s203 = scalar_lea.vmem [#allocation3], %s202
          %s204 = smul.u32 %s26, 2
          %s205 = sadd.s32 %s204, %s27
          %s207 = ssub.s32 1024, 1024
          %208 = vsyncadd %s200, %s207
          %s209 = smul.addr %s205, 128
          %s210 = scalar_lea.hbm %s0, %s209
          %s211 = sshll.u32 %s203, 4
          %s212 = int_to_ptr.vmem [resolvable:$true] %s211
          %217 = dma.hbm_to_vmem [thread:$0]  %s210, 1024, %s212, %s200, 512, 128, 8
        $region20: #{tpu_custom_call.1} parent=15 // pred_fallthru
          _
        // Predicated region
        $region21: #{tpu_custom_call.1} parent=15 // pred_check
          %p218 = pneg %p85
        $region22: #{tpu_custom_call.1} parent=15 // pred_check_branch
          %220 = sbr.rel (%p218) target = $region24
        $region23: #{tpu_custom_call.1} parent=15 // pred_region
          %s221 = sand.u32 %s19, 1
          %s222 = scalar_lea.sflag [#allocation7], %s221
          %s223 = sand.u32 %s75, 1
          %s224 = smul.addr %s223, 4
          %s225 = scalar_lea.vmem [#allocation6], %s224
          %s226 = smul.u32 %s26, 2
          %s227 = sadd.s32 %s226, %s27
          %s229 = ssub.s32 64, 64
          %230 = vsyncadd %s222, %s229
          %s231 = smul.addr %s227, 64
          %s232 = scalar_lea.hbm %s1, %s231
          %s234 = sshll.u32 %s225, 4
          %s235 = int_to_ptr.vmem [resolvable:$true] %s234
          %237 = dma.hbm_to_vmem [thread:$0]  %s232, 64, %s235, %s222
        $region24: #{tpu_custom_call.1} parent=15 // pred_fallthru
          _
        // Predicated region
        $region25: #{tpu_custom_call.1} parent=15 // pred_check
          %p238 = pneg %p115
        $region26: #{tpu_custom_call.1} parent=15 // pred_check_branch
          %240 = sbr.rel (%p238) target = $region28
        $region27: #{tpu_custom_call.1} parent=15 // pred_region
          %s241 = sand.u32 %s19, 1
          %s242 = scalar_lea.sflag [#allocation7], %s241
          %s243 = sand.u32 %s105, 1
          %s244 = smul.addr %s243, 2
          %s245 = scalar_lea.vmem [#allocation8], %s244
          %s246 = smul.u32 %s26, 2
          %s247 = sadd.s32 %s246, %s27
          %s249 = ssub.s32 32, 32
          %250 = vsyncadd %s242, %s249
          %s251 = smul.addr %s247, 32
          %s252 = scalar_lea.hbm %s2, %s251
          %s254 = sshll.u32 %s245, 4
          %s255 = int_to_ptr.vmem [resolvable:$true] %s254
          %257 = dma.hbm_to_vmem [thread:$0]  %s252, 32, %s255, %s242
        $region28: #{tpu_custom_call.1} parent=15 // pred_fallthru
          _
        // Predicated region
        $region29: #{tpu_custom_call.1} parent=15 // pred_check
          %p258 = pneg %p145
        $region30: #{tpu_custom_call.1} parent=15 // pred_check_branch
          %260 = sbr.rel (%p258) target = $region32
        $region31: #{tpu_custom_call.1} parent=15 // pred_region
          %s261 = smul.u32 %s26, 2
          %s262 = sadd.s32 %s261, %s27
          %p263 = scmp.lt.s32.totalorder %s262, 3
          %s264 = scalar_select %p263, %s262, 3
          %s265 = scalar_lea.vmem %s3, %s264
          %s266 = smul.u32 %s26, 2
          %s267 = sadd.s32 %s266, %s27
        $region32: #{tpu_custom_call.1} parent=15 // pred_fallthru
          _
      $region16: #{tpu_custom_call.1} parent=5 // pred_fallthru
        _
      %p268 = scmp.le.s32.totalorder 1, %s19
      %p269 = scmp.lt.s32.totalorder %s19, 5
      %p270 = pnand %p268, %p269
      %p271 = pneg %p270
      // Predicated region
      $region33: #{tpu_custom_call.1} parent=5 // pred_check
        _
      $region34: #{tpu_custom_call.1} parent=5 // pred_check_branch
        %273 = sbr.rel (%p270) target = $region36
      $region35: #{tpu_custom_call.1} parent=5 // pred_region
        %s274 = ssub.s32 %s19, 1
        %s275 = sand.u32 %s48, 1
        %s276 = scalar_lea.sflag [#allocation4], %s275
        %s277 = sand.u32 %s48, 1
        %s278 = smul.addr %s277, 64
        %s279 = scalar_lea.vmem [#allocation3], %s278
        // Predicated region
        $region37: #{tpu_custom_call.1} parent=35 // pred_check
          %p280 = pneg %p61
        $region38: #{tpu_custom_call.1} parent=35 // pred_check_branch
          %282 = sbr.rel (%p280) target = $region40
        $region39: #{tpu_custom_call.1} parent=35 // pred_region
          %283 = dma.done %s276, 1024
        $region40: #{tpu_custom_call.1} parent=35 // pred_fallthru
          _
        %s284 = sand.u32 %s24, 1
        %s285 = scalar_lea.sflag [#allocation7], %s284
        %s286 = sand.u32 %s78, 1
        %s287 = smul.addr %s286, 4
        %s288 = scalar_lea.vmem [#allocation6], %s287
        // Predicated region
        $region41: #{tpu_custom_call.1} parent=35 // pred_check
          %p289 = pneg %p91
        $region42: #{tpu_custom_call.1} parent=35 // pred_check_branch
          %291 = sbr.rel (%p289) target = $region44
        $region43: #{tpu_custom_call.1} parent=35 // pred_region
          %292 = dma.done %s285, 64
        $region44: #{tpu_custom_call.1} parent=35 // pred_fallthru
          _
        %s293 = sand.u32 %s24, 1
        %s294 = scalar_lea.sflag [#allocation7], %s293
        %s295 = sand.u32 %s108, 1
        %s296 = smul.addr %s295, 2
        %s297 = scalar_lea.vmem [#allocation8], %s296
        // Predicated region
        $region45: #{tpu_custom_call.1} parent=35 // pred_check
          %p298 = pneg %p121
        $region46: #{tpu_custom_call.1} parent=35 // pred_check_branch
          %300 = sbr.rel (%p298) target = $region48
        $region47: #{tpu_custom_call.1} parent=35 // pred_region
          %301 = dma.done %s294, 32
        $region48: #{tpu_custom_call.1} parent=35 // pred_fallthru
          _
        %s302 = sand.u32 %s48, 1
        %s303 = scalar_lea.sflag [#allocation4], %s302
        %s304 = sand.u32 %s48, 1
        %s305 = smul.addr %s304, 64
        %s306 = scalar_lea.vmem [#allocation3], %s305
        %p307 = pneg %p61
        %p308 = pneg %p58
        %s309 = sand.u32 %s24, 1
        %s310 = scalar_lea.sflag [#allocation7], %s309
        %s311 = sand.u32 %s78, 1
        %s312 = smul.addr %s311, 4
        %s313 = scalar_lea.vmem [#allocation6], %s312
        %p314 = pneg %p91
        %p315 = pneg %p88
        %s316 = sand.u32 %s24, 1
        %s317 = scalar_lea.sflag [#allocation7], %s316
        %s318 = sand.u32 %s108, 1
        %s319 = smul.addr %s318, 2
        %s320 = scalar_lea.vmem [#allocation8], %s319
        %p321 = pneg %p121
        %p322 = pneg %p118
        %s323 = smul.u32 %s28, 2
        %s324 = sadd.s32 %s323, %s29
        %p325 = scmp.lt.s32.totalorder %s324, 3
        %s326 = scalar_select %p325, %s324, 3
        %s327 = scalar_lea.vmem %s3, %s326
        %p328 = pneg %p151
        %p329 = pneg %p148
        %p330 = pneg %p177
        %p331 = pneg %p174
        %s332 = sand.u32 %s164, 1
        %s333 = scalar_lea.sflag [#allocation5], %s332
        %s334 = sand.u32 %s164, 1
        %s335 = scalar_lea.vmem [#allocation9], %s334
        %s336 = smul.u32 %s28, 2
        %s337 = sadd.s32 %s336, %s29
        %s338 = smul.u32 %s28, 2
        %s339 = sadd.s32 %s338, %s29
        %s340 = smul.u32 %s28, 2
        %s341 = sadd.s32 %s340, %s29
        %s342 = smul.u32 %s28, 2
        %s343 = sadd.s32 %s342, %s29
        %p344 = scmp.lt.s32.totalorder %s343, 3
        %s345 = scalar_select %p344, %s343, 3
        %s346 = scalar_lea.vmem %s3, %s345
        %s347 = smul.u32 %s28, 2
        %s348 = sadd.s32 %s347, %s29
        %p349 = scmp.eq.s32.totalorder %s29, 0
        // Predicated region
        $region49: #{tpu_custom_call.1} parent=35 // pred_check
          %p350 = pneg %p349
        $region50: #{tpu_custom_call.1} parent=35 // pred_check_branch
          %352 = sbr.rel (%p350) target = $region52
        $region51: #{tpu_custom_call.1} parent=35 // pred_region
          %353 = vst [vmem:[#allocation2] sm:$0x1] 0.0
        $region52: #{tpu_custom_call.1} parent=35 // pred_fallthru
          _
        %v354 = vld [vmem:[%s297] sm:$0x3]
        %v355 = vld [vmem:[%s288] sm:$0xf]
        %v356 = vsub.f32 %v354, %v355
        %v358 = vrot.slane %v354, 6
        %v360 = vsub.f32 %v355, %v358
        %vm361 = vcmask 1041408
        %v362 = vsel %vm361, %v356, %v360
        %v363 = vmax.f32 %v362, 0.0
        %v364 = vmin.f32 %v363, 14.99
        %v365 = vld [vmem:[%s279] sm:$0xff]
        %v366 = vld [vmem:[%s279 + $0x8] sm:$0xff]
        %v367 = vld [vmem:[%s279 + $0x10] sm:$0xff]
        %v368 = vld [vmem:[%s279 + $0x18] sm:$0xff]
        %v369 = vld [vmem:[%s279 + $0x20] sm:$0xff]
        %v370 = vld [vmem:[%s279 + $0x28] sm:$0xff]
        %v371 = vld [vmem:[%s279 + $0x30] sm:$0xff]
        %v372 = vld [vmem:[%s279 + $0x38] sm:$0xff]
        %v373 = vmax.f32 %v365, %v366
        %v374 = vrot.slane %v373, 4
        %v375 = vmax.f32 %v373, %v374
        %v376 = vrot.slane %v375, 2
        %v377 = vmax.f32 %v375, %v376
        %v378 = vrot.slane %v377, 1
        %v379 = vmax.f32 %v377, %v378
        %v380 = vmax.f32 %v367, %v368
        %v381 = vrot.slane %v380, 4
        %v382 = vmax.f32 %v380, %v381
        %v383 = vrot.slane %v382, 2
        %v384 = vmax.f32 %v382, %v383
        %v385 = vrot.slane %v384, 1
        %v386 = vmax.f32 %v384, %v385
        %v387 = vmax.f32 %v369, %v370
        %v388 = vrot.slane %v387, 4
        %v389 = vmax.f32 %v387, %v388
        %v390 = vrot.slane %v389, 2
        %v391 = vmax.f32 %v389, %v390
        %v392 = vrot.slane %v391, 1
        %v393 = vmax.f32 %v391, %v392
        %v394 = vmax.f32 %v371, %v372
        %v395 = vrot.slane %v394, 4
        %v396 = vmax.f32 %v394, %v395
        %v397 = vrot.slane %v396, 2
        %v398 = vmax.f32 %v396, %v397
        %v399 = vrot.slane %v398, 1
        %v400 = vmax.f32 %v398, %v399
        %v401 = vsub.f32 %v365, %v379
        %v402 = vsub.f32 %v366, %v379
        %v403 = vsub.f32 %v367, %v386
        %v404 = vsub.f32 %v368, %v386
        %v405 = vsub.f32 %v369, %v393
        %v406 = vsub.f32 %v370, %v393
        %v407 = vsub.f32 %v371, %v400
        %v408 = vsub.f32 %v372, %v400
        %v409 = vmul.f32 %v401, 1.442695
        %v410 = vpow.pop %v409
        %v411 = vmul.f32 %v402, 1.442695
        %v412 = vpow.pop %v411
        %v413 = vmul.f32 %v403, 1.442695
        %v414 = vpow.pop %v413
        %v415 = vmul.f32 %v404, 1.442695
        %v416 = vpow.pop %v415
        %v417 = vmul.f32 %v405, 1.442695
        %v418 = vpow.pop %v417
        %v419 = vmul.f32 %v406, 1.442695
        %v420 = vpow.pop %v419
        %v421 = vmul.f32 %v407, 1.442695
        %v422 = vpow.pop %v421
        %v423 = vmul.f32 %v408, 1.442695
        %v424 = vpow.pop %v423
        %v425 = vadd.f32 %v410, %v412
        %v426 = vrot.slane %v425, 4
        %v427 = vadd.f32 %v425, %v426
        %v428 = vrot.slane %v427, 2
        %v429 = vadd.f32 %v427, %v428
        %v430 = vrot.slane %v429, 1
        %v431 = vadd.f32 %v429, %v430
        %v432 = vadd.f32 %v414, %v416
        %v433 = vrot.slane %v432, 4
        %v434 = vadd.f32 %v432, %v433
        %v435 = vrot.slane %v434, 2
        %v436 = vadd.f32 %v434, %v435
        %v437 = vrot.slane %v436, 1
        %v438 = vadd.f32 %v436, %v437
        %v439 = vadd.f32 %v418, %v420
        %v440 = vrot.slane %v439, 4
        %v441 = vadd.f32 %v439, %v440
        %v442 = vrot.slane %v441, 2
        %v443 = vadd.f32 %v441, %v442
        %v444 = vrot.slane %v443, 1
        %v445 = vadd.f32 %v443, %v444
        %v446 = vadd.f32 %v422, %v424
        %v447 = vrot.slane %v446, 4
        %v448 = vadd.f32 %v446, %v447
        %v449 = vrot.slane %v448, 2
        %v450 = vadd.f32 %v448, %v449
        %v451 = vrot.slane %v450, 1
        %v452 = vadd.f32 %v450, %v451
        %v453 = vlog2.pop %v431
        %v454 = vmul.f32 %v453, 0.6931472
        %v455 = vlog2.pop %v438
        %v456 = vmul.f32 %v455, 0.6931472
        %v457 = vlog2.pop %v445
        %v458 = vmul.f32 %v457, 0.6931472
        %v459 = vlog2.pop %v452
        %v460 = vmul.f32 %v459, 0.6931472
        %v461 = vadd.f32 %v379, %v454
        %v462 = vadd.f32 %v386, %v456
        %v463 = vadd.f32 %v393, %v458
        %v464 = vadd.f32 %v400, %v460
        %v465 = vlaneseq
        %v466 = vshrl.u32 %v465, 7
        %v467 = vadd.s32 %v466, 8
        %v468 = vcvt.s32.f32 %v466
        %v469 = vcvt.s32.f32 %v467
        %v472 = vunpack.c.l.s4 1966171168
        %v473 = vunpack.c.0.s8 %v472
        %v474 = vlaneseq
        %v475 = vshrl.u32 %v474, 7
        %v476 = vsub.s32 %v473, %v475
        %v477 = vrot.slane %v364, %v476
        %v478 = vcombine.high %v477, %v477
        %v480 = vunpack.c.l.s4 1966171168
        %v481 = vunpack.c.0.s8 %v480
        %v482 = vlaneseq
        %v483 = vshrl.u32 %v482, 7
        %v484 = vsub.s32 %v481, %v483
        %v485 = vrot.slane %v477, %v484
        %v487 = vunpack.c.l.s4 1966171168
        %v488 = vunpack.c.0.s8 %v487
        %v489 = vlaneseq
        %v490 = vshrl.u32 %v489, 7
        %v491 = vsub.s32 %v488, %v490
        %v492 = vrot.slane %v478, %v491
        %v493 = vcombine.high %v485, %v485
        %v494 = vcombine.high %v492, %v492
        %v495 = vlaneseq
        %v496 = vshrl.u32 %v495, 7
        %v497 = vsub.s32 0, %v496
        %v498 = vrot.slane %v485, %v497
        %v499 = vlaneseq
        %v500 = vshrl.u32 %v499, 7
        %v501 = vsub.s32 0, %v500
        %v502 = vrot.slane %v492, %v501
        %v503 = vlaneseq
        %v504 = vshrl.u32 %v503, 7
        %v505 = vsub.s32 0, %v504
        %v506 = vrot.slane %v493, %v505
        %v507 = vlaneseq
        %v508 = vshrl.u32 %v507, 7
        %v509 = vsub.s32 0, %v508
        %v510 = vrot.slane %v494, %v509
        %v515 = vsub.f32 %v468, %v498
        %v516 = vsub.f32 %v469, %v498
        %v517 = vsub.f32 %v468, %v502
        %v518 = vsub.f32 %v469, %v502
        %v519 = vsub.f32 %v468, %v506
        %v520 = vsub.f32 %v469, %v506
        %v521 = vsub.f32 %v468, %v510
        %v522 = vsub.f32 %v469, %v510
        %v523 = vand.u32 2147483647, %v515
        %v524 = vand.u32 2147483647, %v516
        %v525 = vand.u32 2147483647, %v517
        %v526 = vand.u32 2147483647, %v518
        %v527 = vand.u32 2147483647, %v519
        %v528 = vand.u32 2147483647, %v520
        %v529 = vand.u32 2147483647, %v521
        %v530 = vand.u32 2147483647, %v522
        %v531 = vsub.f32 1.0, %v523
        %v532 = vsub.f32 1.0, %v524
        %v533 = vsub.f32 1.0, %v525
        %v534 = vsub.f32 1.0, %v526
        %v535 = vsub.f32 1.0, %v527
        %v536 = vsub.f32 1.0, %v528
        %v537 = vsub.f32 1.0, %v529
        %v538 = vsub.f32 1.0, %v530
        %v539 = vmax.f32 %v531, 0.0
        %v540 = vmax.f32 %v532, 0.0
        %v541 = vmax.f32 %v533, 0.0
        %v542 = vmax.f32 %v534, 0.0
        %v543 = vmax.f32 %v535, 0.0
        %v544 = vmax.f32 %v536, 0.0
        %v545 = vmax.f32 %v537, 0.0
        %v546 = vmax.f32 %v538, 0.0
        %v547 = vmul.f32 %v365, %v539
        %v548 = vmul.f32 %v366, %v540
        %v549 = vmul.f32 %v367, %v541
        %v550 = vmul.f32 %v368, %v542
        %v551 = vmul.f32 %v369, %v543
        %v552 = vmul.f32 %v370, %v544
        %v553 = vmul.f32 %v371, %v545
        %v554 = vmul.f32 %v372, %v546
        %v555 = vadd.f32 %v547, %v548
        %v556 = vrot.slane %v555, 4
        %v557 = vadd.f32 %v555, %v556
        %v558 = vrot.slane %v557, 2
        %v559 = vadd.f32 %v557, %v558
        %v560 = vrot.slane %v559, 1
        %v561 = vadd.f32 %v559, %v560
        %v562 = vadd.f32 %v549, %v550
        %v563 = vrot.slane %v562, 4
        %v564 = vadd.f32 %v562, %v563
        %v565 = vrot.slane %v564, 2
        %v566 = vadd.f32 %v564, %v565
        %v567 = vrot.slane %v566, 1
        %v568 = vadd.f32 %v566, %v567
        %v569 = vadd.f32 %v551, %v552
        %v570 = vrot.slane %v569, 4
        %v571 = vadd.f32 %v569, %v570
        %v572 = vrot.slane %v571, 2
        %v573 = vadd.f32 %v571, %v572
        %v574 = vrot.slane %v573, 1
        %v575 = vadd.f32 %v573, %v574
        %v576 = vadd.f32 %v553, %v554
        %v577 = vrot.slane %v576, 4
        %v578 = vadd.f32 %v576, %v577
        %v579 = vrot.slane %v578, 2
        %v580 = vadd.f32 %v578, %v579
        %v581 = vrot.slane %v580, 1
        %v582 = vadd.f32 %v580, %v581
        %v583 = vsub.f32 %v461, %v561
        %v584 = vsub.f32 %v462, %v568
        %v585 = vsub.f32 %v463, %v575
        %v586 = vsub.f32 %v464, %v582
        %v587 = vld [vmem:[%s346] sm:$0x1]
        %vm588 = vcmp.gt.f32.partialorder %v587, 0.0
        %v590 = vlaneseq
        %v591 = vshrl.u32 %v590, 7
        %v592 = vsub.s32 0, %v591
        %v593 = vrot.slane %v587, %v592
        %v595 = vmul.f32 %v583, %v593
        %v596 = vmul.f32 %v584, %v593
        %v597 = vmul.f32 %v585, %v593
        %v598 = vmul.f32 %v586, %v593
        %v599 = vsel %vm588, 1, 0
        %v600 = vlaneseq
        %v601 = vshrl.u32 %v600, 7
        %v602 = vsub.s32 0, %v601
        %v603 = vrot.slane %v599, %v602
        %vm604 = vcmp.eq.s32.totalorder %v603, 1
        %v609 = vrot.slane %v596, 7
        %vm610 = vcmask 1041409
        %v611 = vsel %vm610, %v609, %v595
        %v612 = vrot.slane %v597, 6
        %vm613 = vcmask 1042434
        %v614 = vsel %vm613, %v612, %v611
        %v615 = vrot.slane %v598, 5
        %vm616 = vcmask 1043459
        %v617 = vsel %vm616, %v615, %v614
        %v619 = vsel %vm604, %v617, 0.0
        %v620 = vld [vmem:[#allocation2] sm:$0x1]
        %vm621 = vcmask 1043456
        %v622 = vsel %vm621, %v619, 0.0
        %v623 = vrot.slane %v622, 4
        %v624 = vadd.f32 %v622, %v623
        %v625 = vrot.slane %v624, 2
        %v626 = vadd.f32 %v624, %v625
        %v627 = vrot.slane %v626, 1
        %v628 = vadd.f32 %v626, %v627
        %v629 = vadd.f32 %v620, %v628
        %630 = vst [vmem:[#allocation2] sm:$0x1] %v629
        %p631 = scmp.eq.s32.totalorder %s29, 1
        // Predicated region
        $region53: #{tpu_custom_call.1} parent=35 // pred_check
          %p632 = pneg %p631
        $region54: #{tpu_custom_call.1} parent=35 // pred_check_branch
          %634 = sbr.rel (%p632) target = $region56
        $region55: #{tpu_custom_call.1} parent=35 // pred_region
          %v635 = vld [vmem:[#allocation2] sm:$0x1]
          %vm636 = vcmask 1040384
          %v637 = vsel %vm636, %v635, 0.0
          %638 = vadd.xlane.f32.xlu0 %v637
          %v639 = vpop.xlane.xlu0 %638
          %640 = vst [vmem:[%s335] sm:$0x1] %v639
        $region56: #{tpu_custom_call.1} parent=35 // pred_fallthru
          _
        %s641 = sand.u32 %s164, 1
        %s642 = scalar_lea.sflag [#allocation5], %s641
        %s643 = sand.u32 %s164, 1
        %s644 = scalar_lea.vmem [#allocation9], %s643
        // Predicated region
        $region57: #{tpu_custom_call.1} parent=35 // pred_check
          %p645 = pneg %p174
        $region58: #{tpu_custom_call.1} parent=35 // pred_check_branch
          %647 = sbr.rel (%p645) target = $region60
        $region59: #{tpu_custom_call.1} parent=35 // pred_region
          %s649 = ssub.s32 16, 16
          %650 = vsyncadd %s642, %s649
          %s651 = smul.addr %s28, 16
          %s652 = scalar_lea.hbm %s4, %s651
          %s654 = sshll.u32 %s644, 4
          %s655 = int_to_ptr.vmem [resolvable:$true] %s654
          %657 = dma.vmem_to_hbm [thread:$0]  %s655, 16, %s652, %s642
        $region60: #{tpu_custom_call.1} parent=35 // pred_fallthru
          _
      $region36: #{tpu_custom_call.1} parent=5 // pred_fallthru
        _
      %p658 = scmp.le.s32.totalorder 2, %s19
      // Predicated region
      $region61: #{tpu_custom_call.1} parent=5 // pred_check
        %p659 = pneg %p658
      $region62: #{tpu_custom_call.1} parent=5 // pred_check_branch
        %661 = sbr.rel (%p659) target = $region64
      $region63: #{tpu_custom_call.1} parent=5 // pred_region
        %s662 = ssub.s32 %s19, 2
        // Predicated region
        $region65: #{tpu_custom_call.1} parent=63 // pred_check
          %p663 = pneg %p180
        $region66: #{tpu_custom_call.1} parent=63 // pred_check_branch
          %665 = sbr.rel (%p663) target = $region68
        $region67: #{tpu_custom_call.1} parent=63 // pred_region
          %s666 = sand.u32 %s165, 1
          %s667 = scalar_lea.sflag [#allocation5], %s666
          %s668 = sand.u32 %s165, 1
          %s669 = scalar_lea.vmem [#allocation9], %s668
          %670 = dma.done %s667, 16
        $region68: #{tpu_custom_call.1} parent=63 // pred_fallthru
          _
      $region64: #{tpu_custom_call.1} parent=5 // pred_fallthru
        _
    $region6: #{tpu_custom_call.1} parent=1 // loop_footer
      %s23 = sadd.s32 1, %s19
    $region7: #{tpu_custom_call.1} parent=1 // loop_footer_branch
      %18 = sbr.rel target = $region3
    $region8: #{tpu_custom_call.1} parent=1 // loop_exit
      _
    %671 = vsyncpa [#allocation4], 1
    %s672 = scalar_lea.sflag [#allocation4], 1
    %673 = vsyncpa %s672, 1
    %674 = vsyncpa [#allocation7], 1
    %s675 = scalar_lea.sflag [#allocation7], 1
    %676 = vsyncpa %s675, 1
    %677 = vsyncpa [#allocation5], 1
    %s678 = scalar_lea.sflag [#allocation5], 1
    %679 = vsyncpa %s678, 1

</llo_original>
